<compile_context>
chip_gen: v5e
topology: v5e:2x2
jax: 0.10.0
libtpu: 0.0.40
codegen_flags: <defaults>
</compile_context>

<pallas_src>
import numpy as np
import jax
import jax.numpy as jnp
from jax.experimental import pallas as pl
from jax.experimental.pallas import tpu as pltpu

LANE = 128
SUBLANE = 8


def _round_up(x, m):
    return ((x + m - 1) // m) * m


# ----------------------------------------------------------------------------
# Kernel
# ----------------------------------------------------------------------------
def net_kernel(x_ref, w1_ref, b1_ref, w2_ref, b2_ref, w3_ref, b3_ref,
               diag_mask_ref, o_ref):
    # hidden layer 1: relu(x @ W1 + b1)
    h = jnp.dot(x_ref[...], w1_ref[...], preferred_element_type=jnp.float32)
    h = jnp.maximum(h + b1_ref[...], 0.0)
    # hidden layer 2: relu(h @ W2 + b2)
    h = jnp.dot(h, w2_ref[...], preferred_element_type=jnp.float32)
    h = jnp.maximum(h + b2_ref[...], 0.0)
    # output layer (no nonlinearity)
    y = jnp.dot(h, w3_ref[...], preferred_element_type=jnp.float32)
    y = y + b3_ref[...]
    # x[..., idx_diag] = x[..., idx_diag] ** 2   (full_covariance=True branch)
    m = diag_mask_ref[...]                       # (1, dop), 1.0 at diag idx
    o_ref[...] = jnp.where(m > 0.0, y * y, y).astype(o_ref.dtype)


# ----------------------------------------------------------------------------
# Wrapper
# ----------------------------------------------------------------------------
def net_forward(x, params, diag_mask, *, batch_tile_target=1024):
    """x: (B, dim_input) f32. params: dict W1,b1,W2,b2,W3,b3 (W as [in,out], b as [1,out]).
    diag_mask: (1, dim_out) with 1.0 at the diagonal-covariance indices."""
    B, dim_in = x.shape
    w1, b1, w2, b2, w3, b3 = (params[k] for k in ("W1", "b1", "W2", "b2", "W3", "b3"))
    d_h1, d_h2, d_out = w1.shape[1], w2.shape[1], w3.shape[1]

    # Lane-dense padded feature widths (multiples of 128).
    h1p = _round_up(d_h1, LANE)
    h2p = _round_up(d_h2, LANE)
    dop = _round_up(d_out, LANE)

    # Batch tile: as large as the target, but keep >=2 grid steps when the batch
    # allows it (v7x has 2 TensorCores) and keep it sublane(8)-aligned.
    bt = min(batch_tile_target, max(SUBLANE, _round_up(pl.cdiv(B, 2), SUBLANE)))
    bt = _round_up(bt, SUBLANE)
    b_pad = _round_up(max(B, bt), bt)
    grid = (b_pad // bt,)

    def pad2(a, rows, cols):
        a = jnp.asarray(a, jnp.float32)
        return jnp.pad(a, ((0, rows - a.shape[0]), (0, cols - a.shape[1])))

    x_p  = pad2(x, b_pad, dim_in)
    w1_p = pad2(w1, dim_in, h1p)
    b1_p = pad2(b1, 1, h1p)
    w2_p = pad2(w2, h1p, h2p)
    b2_p = pad2(b2, 1, h2p)
    w3_p = pad2(w3, h2p, dop)
    b3_p = pad2(b3, 1, dop)
    mask_p = pad2(diag_mask, 1, dop)

    # Grid-invariant operands: constant index_map -> DMA'd once, kept resident.
    full = lambda shape: pl.BlockSpec(shape, lambda i: (0, 0))

    flops = 2 * b_pad * (dim_in * h1p + h1p * h2p + h2p * dop)
    bytes_accessed = 4 * (b_pad * (dim_in + dop)
                          + dim_in * h1p + h1p * h2p + h2p * dop
                          + 3 * dop)

    out = pl.pallas_call(
        net_kernel,
        out_shape=jax.ShapeDtypeStruct((b_pad, dop), jnp.float32),
        grid_spec=pltpu.PrefetchScalarGridSpec(
            num_scalar_prefetch=0,
            grid=grid,
            in_specs=[
                pl.BlockSpec((bt, dim_in), lambda i: (i, 0)),   # x tile
                full((dim_in, h1p)),                            # W1
                full((1, h1p)),                                 # b1
                full((h1p, h2p)),                               # W2
                full((1, h2p)),                                 # b2
                full((h2p, dop)),                               # W3
                full((1, dop)),                                 # b3
                full((1, dop)),                                 # diag mask
            ],
            out_specs=pl.BlockSpec((bt, dop), lambda i: (i, 0)),
        ),
        compiler_params=pltpu.CompilerParams(
            dimension_semantics=("parallel",)),
        cost_estimate=pl.CostEstimate(
            flops=flops, transcendentals=0, bytes_accessed=bytes_accessed),
    )(x_p, w1_p, b1_p, w2_p, b2_p, w3_p, b3_p, mask_p)

    return out[:B, :d_out]


# ----------------------------------------------------------------------------
# Deterministic parameter construction (mirrors Net.__init__ shapes)
# ----------------------------------------------------------------------------
def make_params(key, dim_input, dim_hidden, dim_output):
    dims = [dim_input] + list(dim_hidden) + [dim_output]
    params = {}
    keys = jax.random.split(key, 2 * (len(dims) - 1))
    for li in range(len(dims) - 1):
        fan_in, fan_out = dims[li], dims[li + 1]
        kw, kb = keys[2 * li], keys[2 * li + 1]
        bound = 1.0 / np.sqrt(fan_in)
        # stored as (in, out) so kernel does x @ W
        params[f"W{li + 1}"] = jax.random.uniform(
            kw, (fan_in, fan_out), jnp.float32, -bound, bound)
        params[f"b{li + 1}"] = jax.random.uniform(
            kb, (1, fan_out), jnp.float32, -bound, bound)
    return params


def make_diag_mask(dim_distribution, dim_output):
    idx_tmp = np.arange(dim_distribution)
    idx_diag = (dim_distribution * (1 + idx_tmp) - idx_tmp * (idx_tmp - 1) / 2).astype(int)
    mask = np.zeros((1, dim_output), dtype=np.float32)
    mask[0, idx_diag] = 1.0
    return jnp.asarray(mask)


def reference_forward(x, params, diag_mask):
    h = jnp.maximum(x @ params["W1"] + params["b1"], 0.0)
    h = jnp.maximum(h @ params["W2"] + params["b2"], 0.0)
    y = h @ params["W3"] + params["b3"]
    return jnp.where(diag_mask > 0.0, y * y, y)


# TODO(synk): the 'convolutional' variant (Conv2d + max_pool2d front-end) is not
# implemented here; only the default 'feedforward' path runs in Pallas.

if __name__ == "__main__":
    # Module config (Net defaults: dim_hidden=[50, 50], full_covariance=True):
    dim_distribution = 3
    dim_input = 16
    dim_hidden = [50, 50]
    dim_output = int(dim_distribution + dim_distribution * (dim_distribution + 1) / 2)  # = 9

    key = jax.random.PRNGKey(0)
    k_param, k_x = jax.random.split(key)
    params = make_params(k_param, dim_input, dim_hidden, dim_output)
    diag_mask = make_diag_mask(dim_distribution, dim_output)

    # Batch deliberately NOT a multiple of the tile, to exercise the padded path;
    # the wrapper picks a tile giving 2 grid steps here.
    batch = 200
    x = jax.random.normal(k_x, (batch, dim_input), jnp.float32)

    out = net_forward(x, params, diag_mask)
    out = jax.block_until_ready(out)

    ref = reference_forward(x, params, diag_mask)
    np.testing.assert_allclose(np.asarray(out), np.asarray(ref), rtol=1e-5, atol=1e-5)
    assert out.shape == (batch, dim_output)

    print("KERNEL_OK")
</pallas_src>

<mosaic_0001>
module attributes {stable_mosaic.version = 11 : i64} {
  func.func @net_kernel(%arg0: i32, %arg1: memref<104x16xf32, #tpu.memory_space<vmem>>, %arg2: memref<16x128xf32, #tpu.memory_space<vmem>>, %arg3: memref<1x128xf32, #tpu.memory_space<vmem>>, %arg4: memref<128x128xf32, #tpu.memory_space<vmem>>, %arg5: memref<1x128xf32, #tpu.memory_space<vmem>>, %arg6: memref<128x128xf32, #tpu.memory_space<vmem>>, %arg7: memref<1x128xf32, #tpu.memory_space<vmem>>, %arg8: memref<1x128xf32, #tpu.memory_space<vmem>>, %arg9: memref<104x128xf32, #tpu.memory_space<vmem>>) attributes {dimension_semantics = [#tpu.dimension_semantics<parallel>], iteration_bounds = array<i64: 2>, scalar_prefetch = 0 : i64, scratch_operands = 0 : i64, tpu.core_type = #tpu.core_type<tc>, window_params = [{transform_indices = @transform_0, window_bounds = array<i64: 104, 16>}, {pipeline_mode = #tpu.pipeline_mode<synchronous>, transform_indices = @transform_1, window_bounds = array<i64: 16, 128>}, {pipeline_mode = #tpu.pipeline_mode<synchronous>, transform_indices = @transform_2, window_bounds = array<i64: 1, 128>}, {pipeline_mode = #tpu.pipeline_mode<synchronous>, transform_indices = @transform_3, window_bounds = array<i64: 128, 128>}, {pipeline_mode = #tpu.pipeline_mode<synchronous>, transform_indices = @transform_4, window_bounds = array<i64: 1, 128>}, {pipeline_mode = #tpu.pipeline_mode<synchronous>, transform_indices = @transform_5, window_bounds = array<i64: 128, 128>}, {pipeline_mode = #tpu.pipeline_mode<synchronous>, transform_indices = @transform_6, window_bounds = array<i64: 1, 128>}, {pipeline_mode = #tpu.pipeline_mode<synchronous>, transform_indices = @transform_7, window_bounds = array<i64: 1, 128>}, {transform_indices = @transform_8, window_bounds = array<i64: 104, 128>}]} {
    %c0 = arith.constant 0 : index
    %c0_0 = arith.constant 0 : index
    %0 = vector.load %arg1[%c0, %c0_0] : memref<104x16xf32, #tpu.memory_space<vmem>>, vector<104x16xf32>
    %c0_1 = arith.constant 0 : index
    %c0_2 = arith.constant 0 : index
    %1 = vector.load %arg2[%c0_1, %c0_2] : memref<16x128xf32, #tpu.memory_space<vmem>>, vector<16x128xf32>
    %cst = arith.constant dense<0.000000e+00> : vector<104x128xf32>
    %2 = tpu.matmul %0, %1, %cst {dimension_numbers = #tpu.dot_dimension_numbers<[1], [0], [0], [1], [0, 0, 1, 1], [], []>} : vector<104x16xf32>, vector<16x128xf32>, vector<104x128xf32> -> vector<104x128xf32>
    %c0_3 = arith.constant 0 : index
    %c0_4 = arith.constant 0 : index
    %3 = vector.load %arg3[%c0_3, %c0_4] : memref<1x128xf32, #tpu.memory_space<vmem>>, vector<1x128xf32>
    %4 = vector.broadcast %3 : vector<1x128xf32> to vector<104x128xf32>
    %5 = arith.addf %2, %4 : vector<104x128xf32>
    %cst_5 = arith.constant 0.000000e+00 : f32
    %6 = vector.broadcast %cst_5 : f32 to vector<104x128xf32>
    %7 = arith.maximumf %5, %6 : vector<104x128xf32>
    %c0_6 = arith.constant 0 : index
    %c0_7 = arith.constant 0 : index
    %8 = vector.load %arg4[%c0_6, %c0_7] : memref<128x128xf32, #tpu.memory_space<vmem>>, vector<128x128xf32>
    %cst_8 = arith.constant dense<0.000000e+00> : vector<104x128xf32>
    %9 = tpu.matmul %7, %8, %cst_8 {dimension_numbers = #tpu.dot_dimension_numbers<[1], [0], [0], [1], [0, 0, 1, 1], [], []>} : vector<104x128xf32>, vector<128x128xf32>, vector<104x128xf32> -> vector<104x128xf32>
    %c0_9 = arith.constant 0 : index
    %c0_10 = arith.constant 0 : index
    %10 = vector.load %arg5[%c0_9, %c0_10] : memref<1x128xf32, #tpu.memory_space<vmem>>, vector<1x128xf32>
    %11 = vector.broadcast %10 : vector<1x128xf32> to vector<104x128xf32>
    %12 = arith.addf %9, %11 : vector<104x128xf32>
    %cst_11 = arith.constant 0.000000e+00 : f32
    %13 = vector.broadcast %cst_11 : f32 to vector<104x128xf32>
    %14 = arith.maximumf %12, %13 : vector<104x128xf32>
    %c0_12 = arith.constant 0 : index
    %c0_13 = arith.constant 0 : index
    %15 = vector.load %arg6[%c0_12, %c0_13] : memref<128x128xf32, #tpu.memory_space<vmem>>, vector<128x128xf32>
    %cst_14 = arith.constant dense<0.000000e+00> : vector<104x128xf32>
    %16 = tpu.matmul %14, %15, %cst_14 {dimension_numbers = #tpu.dot_dimension_numbers<[1], [0], [0], [1], [0, 0, 1, 1], [], []>} : vector<104x128xf32>, vector<128x128xf32>, vector<104x128xf32> -> vector<104x128xf32>
    %c0_15 = arith.constant 0 : index
    %c0_16 = arith.constant 0 : index
    %17 = vector.load %arg7[%c0_15, %c0_16] : memref<1x128xf32, #tpu.memory_space<vmem>>, vector<1x128xf32>
    %18 = vector.broadcast %17 : vector<1x128xf32> to vector<104x128xf32>
    %19 = arith.addf %16, %18 : vector<104x128xf32>
    %c0_17 = arith.constant 0 : index
    %c0_18 = arith.constant 0 : index
    %20 = vector.load %arg8[%c0_17, %c0_18] : memref<1x128xf32, #tpu.memory_space<vmem>>, vector<1x128xf32>
    %cst_19 = arith.constant 0.000000e+00 : f32
    %21 = vector.broadcast %cst_19 : f32 to vector<1x128xf32>
    %22 = arith.cmpf ogt, %20, %21 : vector<1x128xf32>
    %23 = arith.mulf %19, %19 : vector<104x128xf32>
    %24 = vector.shape_cast %22 : vector<1x128xi1> to vector<1x128xi1>
    %25 = vector.broadcast %24 : vector<1x128xi1> to vector<104x128xi1>
    %26 = arith.select %25, %23, %19 : vector<104x128xi1>, vector<104x128xf32>
    %c0_20 = arith.constant 0 : index
    %c0_21 = arith.constant 0 : index
    %27 = vector.load %arg9[%c0_20, %c0_21] : memref<104x128xf32, #tpu.memory_space<vmem>>, vector<104x128xf32>
    tpu.vector_store %arg9[%c0_20, %c0_21], %26 {strides = array<i32>} : memref<104x128xf32, #tpu.memory_space<vmem>>, vector<104x128xf32>,
    return
  }
  func.func @transform_0(%arg0: i32) -> (i32, i32) {
    %c0_i32 = arith.constant 0 : i32
    %c0_i32_0 = arith.constant 0 : i32
    return %arg0, %c0_i32 : i32, i32
  }
  func.func @transform_1(%arg0: i32) -> (i32, i32) {
    %c0_i32 = arith.constant 0 : i32
    %c0_i32_0 = arith.constant 0 : i32
    %c0_i32_1 = arith.constant 0 : i32
    return %c0_i32, %c0_i32_0 : i32, i32
  }
  func.func @transform_2(%arg0: i32) -> (i32, i32) {
    %c0_i32 = arith.constant 0 : i32
    %c0_i32_0 = arith.constant 0 : i32
    %c0_i32_1 = arith.constant 0 : i32
    return %c0_i32, %c0_i32_0 : i32, i32
  }
  func.func @transform_3(%arg0: i32) -> (i32, i32) {
    %c0_i32 = arith.constant 0 : i32
    %c0_i32_0 = arith.constant 0 : i32
    %c0_i32_1 = arith.constant 0 : i32
    return %c0_i32, %c0_i32_0 : i32, i32
  }
  func.func @transform_4(%arg0: i32) -> (i32, i32) {
    %c0_i32 = arith.constant 0 : i32
    %c0_i32_0 = arith.constant 0 : i32
    %c0_i32_1 = arith.constant 0 : i32
    return %c0_i32, %c0_i32_0 : i32, i32
  }
  func.func @transform_5(%arg0: i32) -> (i32, i32) {
    %c0_i32 = arith.constant 0 : i32
    %c0_i32_0 = arith.constant 0 : i32
    %c0_i32_1 = arith.constant 0 : i32
    return %c0_i32, %c0_i32_0 : i32, i32
  }
  func.func @transform_6(%arg0: i32) -> (i32, i32) {
    %c0_i32 = arith.constant 0 : i32
    %c0_i32_0 = arith.constant 0 : i32
    %c0_i32_1 = arith.constant 0 : i32
    return %c0_i32, %c0_i32_0 : i32, i32
  }
  func.func @transform_7(%arg0: i32) -> (i32, i32) {
    %c0_i32 = arith.constant 0 : i32
    %c0_i32_0 = arith.constant 0 : i32
    %c0_i32_1 = arith.constant 0 : i32
    return %c0_i32, %c0_i32_0 : i32, i32
  }
  func.func @transform_8(%arg0: i32) -> (i32, i32) {
    %c0_i32 = arith.constant 0 : i32
    %c0_i32_0 = arith.constant 0 : i32
    return %arg0, %c0_i32 : i32, i32
  }
}

</mosaic_0001>

<llo_original>
// kernel: tpu_custom_call.1
$region0: #{tpu_custom_call.1}
  #allocation0 [shape = 'u32[]', space=smem, size = 0x4, offset = 0x4, fixed_abs, tag = 'smem constant byte address 0x4 - core index']
  #allocation1 [shape = 'u32[72,128]{1,0:T(1,128)}', space=vmem, size = 0x9000, scoped, tag = 'internal scratch']
  %s0 = inlined_call_operand.vmem [shape: f32[208,16], index: 0, kind: input, shape index: {}]
  %s1 = inlined_call_operand.vmem [shape: f32[16,128], index: 1, kind: input, shape index: {}]
  %s2 = inlined_call_operand.vmem [shape: f32[1,128], index: 2, kind: input, shape index: {}]
  %s3 = inlined_call_operand.vmem [shape: f32[128,128], index: 3, kind: input, shape index: {}]
  %s4 = inlined_call_operand.vmem [shape: f32[1,128], index: 4, kind: input, shape index: {}]
  %s5 = inlined_call_operand.hbm [shape: f32[128,128], index: 5, kind: input, shape index: {}]
  %s6 = inlined_call_operand.vmem [shape: f32[1,128], index: 6, kind: input, shape index: {}]
  %s7 = inlined_call_operand.vmem [shape: f32[1,128], index: 7, kind: input, shape index: {}]
  %s8 = inlined_call_operand.hbm [shape: f32[208,128], index: 8, kind: output, shape index: {}]
  %s9 = sld [smem:[#allocation0]]
  $region69: #{tpu_custom_call.1} parent=0
    _
  %s11 = ssub.s32 1, %s9
  %s12 = scalar_select 0, %s11, %s9
  $region1: #{tpu_custom_call.1} parent=0
    #allocation2 [shape = 'u8[65536]{0}', space=vmem, size = 0x10000, scoped, tag = 'input window, operand 5, single buffered']
    #allocation3 [shape = 's32[2]{0}', space=sflag, size = 0x8, scoped, tag = 'scoped memory for tpu_custom_call.1']
    #allocation4 [shape = 's32[2]{0}', space=sflag, size = 0x8, scoped, tag = 'scoped memory for tpu_custom_call.1']
    #allocation5 [shape = 'u8[106496]{0}', space=vmem, size = 0x1a000, scoped, tag = 'output window, operand 0']
    %13 = vsyncpa [#allocation3], 0
    %14 = vsyncpa [#allocation4], 0
    %s15 = scalar_lea.sflag [#allocation4], 1
    %16 = vsyncpa %s15, 0
    loop: start=0, step=1, limit=4
    $region2: #{tpu_custom_call.1} parent=1 // loop_pre_header
      _
    $region3: #{tpu_custom_call.1} parent=1 // loop_header
      %s18 = sphi 0, %s22
      %p19 = scmp.ge.s32.totalorder %s18, 4
      %s28 = sphi 0, %s30
      %s31 = sphi 0, %s28
      %s32 = sphi 0, %s31
      %s48 = sphi 0, %s32
      %s52 = sphi 0, %s52
      %s54 = sphi 0, %s52
      %s55 = sphi 0, %s54
      %s69 = sphi 0, %s55
      %s73 = sphi 0, %s73
      %s75 = sphi 0, %s73
      %s76 = sphi 0, %s75
      %s90 = sphi 0, %s76
      %s94 = sphi 0, %s94
      %s96 = sphi 0, %s94
      %s97 = sphi 0, %s96
      %s111 = sphi 0, %s97
      %s115 = sphi 0, %s115
      %s117 = sphi 0, %s115
      %s118 = sphi 0, %s117
      %s132 = sphi 0, %s118
      %s136 = sphi 0, %s136
      %s138 = sphi 0, %s136
      %s139 = sphi 0, %s138
      %s153 = sphi 0, %s139
      %s157 = sphi 0, %s157
      %s159 = sphi 0, %s157
      %s160 = sphi 0, %s159
      %s174 = sphi 0, %s160
      %s178 = sphi 0, %s178
      %s180 = sphi 0, %s178
      %s181 = sphi 0, %s180
      %s195 = sphi 0, %s181
      %s201 = sphi 0, %s203
      %s204 = sphi 0, %s201
      %s205 = sphi 0, %s204
      %s221 = sphi 0, %s205
    $region4: #{tpu_custom_call.1} parent=1 // loop_header_branch
      %21 = sbr.rel (%p19) target = $region8
    $region5: #{tpu_custom_call.1} parent=1 // loop_body
      %s23 = ssub.s32 %s18, 1
      %s24 = ssub.s32 %s18, 2
      %s25 = sadd.s32 %s18, 1
      %s26 = ssub.s32 %s18, %s25
      %p27 = scmp.eq.s32.totalorder %s26, 0
      %s29 = sadd.s32 %s28, 1
      %s30 = scalar_select %p27, %s28, %s29
      %p33 = pneg %p27
      %p34 = scmp.eq.s32.totalorder %s18, 1
      %p35 = por %p33, %p34
      %p36 = scmp.ne.s32.totalorder %s28, %s31
      %p37 = scmp.eq.s32.totalorder %s18, 0
      %p38 = por %p36, %p37
      %p39 = scmp.ne.s32.totalorder %s28, %s31
      %p40 = scmp.eq.s32.totalorder %s23, 1
      %p41 = por %p39, %p40
      %p42 = scmp.ne.s32.totalorder %s31, %s32
      %p43 = scmp.eq.s32.totalorder %s23, 0
      %p44 = por %p42, %p43
      %p45 = scmp.ne.s32.totalorder %s31, %s32
      %p46 = scmp.eq.s32.totalorder %s24, 1
      %p47 = por %p45, %p46
      %p49 = scmp.ne.s32.totalorder %s32, %s48
      %p50 = scmp.eq.s32.totalorder %s24, 0
      %p51 = por %p49, %p50
      %s53 = sadd.s32 %s52, 1
      %p56 = scmp.eq.s32.totalorder %s18, 1
      %p57 = scmp.ne.s32.totalorder %s52, %s54
      %p58 = scmp.eq.s32.totalorder %s18, 0
      %p59 = por %p57, %p58
      %p60 = scmp.ne.s32.totalorder %s52, %s54
      %p61 = scmp.eq.s32.totalorder %s23, 1
      %p62 = por %p60, %p61
      %p63 = scmp.ne.s32.totalorder %s54, %s55
      %p64 = scmp.eq.s32.totalorder %s23, 0
      %p65 = por %p63, %p64
      %p66 = scmp.ne.s32.totalorder %s54, %s55
      %p67 = scmp.eq.s32.totalorder %s24, 1
      %p68 = por %p66, %p67
      %p70 = scmp.ne.s32.totalorder %s55, %s69
      %p71 = scmp.eq.s32.totalorder %s24, 0
      %p72 = por %p70, %p71
      %s74 = sadd.s32 %s73, 1
      %p77 = scmp.eq.s32.totalorder %s18, 1
      %p78 = scmp.ne.s32.totalorder %s73, %s75
      %p79 = scmp.eq.s32.totalorder %s18, 0
      %p80 = por %p78, %p79
      %p81 = scmp.ne.s32.totalorder %s73, %s75
      %p82 = scmp.eq.s32.totalorder %s23, 1
      %p83 = por %p81, %p82
      %p84 = scmp.ne.s32.totalorder %s75, %s76
      %p85 = scmp.eq.s32.totalorder %s23, 0
      %p86 = por %p84, %p85
      %p87 = scmp.ne.s32.totalorder %s75, %s76
      %p88 = scmp.eq.s32.totalorder %s24, 1
      %p89 = por %p87, %p88
      %p91 = scmp.ne.s32.totalorder %s76, %s90
      %p92 = scmp.eq.s32.totalorder %s24, 0
      %p93 = por %p91, %p92
      %s95 = sadd.s32 %s94, 1
      %p98 = scmp.eq.s32.totalorder %s18, 1
      %p99 = scmp.ne.s32.totalorder %s94, %s96
      %p100 = scmp.eq.s32.totalorder %s18, 0
      %p101 = por %p99, %p100
      %p102 = scmp.ne.s32.totalorder %s94, %s96
      %p103 = scmp.eq.s32.totalorder %s23, 1
      %p104 = por %p102, %p103
      %p105 = scmp.ne.s32.totalorder %s96, %s97
      %p106 = scmp.eq.s32.totalorder %s23, 0
      %p107 = por %p105, %p106
      %p108 = scmp.ne.s32.totalorder %s96, %s97
      %p109 = scmp.eq.s32.totalorder %s24, 1
      %p110 = por %p108, %p109
      %p112 = scmp.ne.s32.totalorder %s97, %s111
      %p113 = scmp.eq.s32.totalorder %s24, 0
      %p114 = por %p112, %p113
      %s116 = sadd.s32 %s115, 1
      %p119 = scmp.eq.s32.totalorder %s18, 1
      %p120 = scmp.ne.s32.totalorder %s115, %s117
      %p121 = scmp.eq.s32.totalorder %s18, 0
      %p122 = por %p120, %p121
      %p123 = scmp.ne.s32.totalorder %s115, %s117
      %p124 = scmp.eq.s32.totalorder %s23, 1
      %p125 = por %p123, %p124
      %p126 = scmp.ne.s32.totalorder %s117, %s118
      %p127 = scmp.eq.s32.totalorder %s23, 0
      %p128 = por %p126, %p127
      %p129 = scmp.ne.s32.totalorder %s117, %s118
      %p130 = scmp.eq.s32.totalorder %s24, 1
      %p131 = por %p129, %p130
      %p133 = scmp.ne.s32.totalorder %s118, %s132
      %p134 = scmp.eq.s32.totalorder %s24, 0
      %p135 = por %p133, %p134
      %s137 = sadd.s32 %s136, 1
      %p140 = scmp.eq.s32.totalorder %s18, 1
      %p141 = scmp.ne.s32.totalorder %s136, %s138
      %p142 = scmp.eq.s32.totalorder %s18, 0
      %p143 = por %p141, %p142
      %p144 = scmp.ne.s32.totalorder %s136, %s138
      %p145 = scmp.eq.s32.totalorder %s23, 1
      %p146 = por %p144, %p145
      %p147 = scmp.ne.s32.totalorder %s138, %s139
      %p148 = scmp.eq.s32.totalorder %s23, 0
      %p149 = por %p147, %p148
      %p150 = scmp.ne.s32.totalorder %s138, %s139
      %p151 = scmp.eq.s32.totalorder %s24, 1
      %p152 = por %p150, %p151
      %p154 = scmp.ne.s32.totalorder %s139, %s153
      %p155 = scmp.eq.s32.totalorder %s24, 0
      %p156 = por %p154, %p155
      %s158 = sadd.s32 %s157, 1
      %p161 = scmp.eq.s32.totalorder %s18, 1
      %p162 = scmp.ne.s32.totalorder %s157, %s159
      %p163 = scmp.eq.s32.totalorder %s18, 0
      %p164 = por %p162, %p163
      %p165 = scmp.ne.s32.totalorder %s157, %s159
      %p166 = scmp.eq.s32.totalorder %s23, 1
      %p167 = por %p165, %p166
      %p168 = scmp.ne.s32.totalorder %s159, %s160
      %p169 = scmp.eq.s32.totalorder %s23, 0
      %p170 = por %p168, %p169
      %p171 = scmp.ne.s32.totalorder %s159, %s160
      %p172 = scmp.eq.s32.totalorder %s24, 1
      %p173 = por %p171, %p172
      %p175 = scmp.ne.s32.totalorder %s160, %s174
      %p176 = scmp.eq.s32.totalorder %s24, 0
      %p177 = por %p175, %p176
      %s179 = sadd.s32 %s178, 1
      %p182 = scmp.eq.s32.totalorder %s18, 1
      %p183 = scmp.ne.s32.totalorder %s178, %s180
      %p184 = scmp.eq.s32.totalorder %s18, 0
      %p185 = por %p183, %p184
      %p186 = scmp.ne.s32.totalorder %s178, %s180
      %p187 = scmp.eq.s32.totalorder %s23, 1
      %p188 = por %p186, %p187
      %p189 = scmp.ne.s32.totalorder %s180, %s181
      %p190 = scmp.eq.s32.totalorder %s23, 0
      %p191 = por %p189, %p190
      %p192 = scmp.ne.s32.totalorder %s180, %s181
      %p193 = scmp.eq.s32.totalorder %s24, 1
      %p194 = por %p192, %p193
      %p196 = scmp.ne.s32.totalorder %s181, %s195
      %p197 = scmp.eq.s32.totalorder %s24, 0
      %p198 = por %p196, %p197
      %s199 = ssub.s32 %s18, %s25
      %p200 = scmp.eq.s32.totalorder %s199, 0
      %s202 = sadd.s32 %s201, 1
      %s203 = scalar_select %p200, %s201, %s202
      %p206 = pneg %p200
      %p207 = scmp.eq.s32.totalorder %s18, 1
      %p208 = por %p206, %p207
      %p209 = scmp.ne.s32.totalorder %s201, %s204
      %p210 = scmp.eq.s32.totalorder %s18, 0
      %p211 = por %p209, %p210
      %p212 = scmp.ne.s32.totalorder %s201, %s204
      %p213 = scmp.eq.s32.totalorder %s23, 1
      %p214 = por %p212, %p213
      %p215 = scmp.ne.s32.totalorder %s204, %s205
      %p216 = scmp.eq.s32.totalorder %s23, 0
      %p217 = por %p215, %p216
      %p218 = scmp.ne.s32.totalorder %s204, %s205
      %p219 = scmp.eq.s32.totalorder %s24, 1
      %p220 = por %p218, %p219
      %p222 = scmp.ne.s32.totalorder %s205, %s221
      %p223 = scmp.eq.s32.totalorder %s24, 0
      %p224 = por %p222, %p223
      %p225 = scmp.le.s32.totalorder 1, %s18
      %p226 = scmp.lt.s32.totalorder %s18, 3
      %p227 = pnand %p225, %p226
      %p228 = pneg %p227
      // Predicated region
      $region9: #{tpu_custom_call.1} parent=5 // pred_check
        _
      $region10: #{tpu_custom_call.1} parent=5 // pred_check_branch
        %230 = sbr.rel (%p227) target = $region12
      $region11: #{tpu_custom_call.1} parent=5 // pred_region
        %s231 = ssub.s32 %s18, 1
        // Predicated region
        $region13: #{tpu_custom_call.1} parent=11 // pred_check
          %p232 = pneg %p65
        $region14: #{tpu_custom_call.1} parent=11 // pred_check_branch
          %234 = sbr.rel (%p232) target = $region16
        $region15: #{tpu_custom_call.1} parent=11 // pred_region
          _
        $region16: #{tpu_custom_call.1} parent=11 // pred_fallthru
          _
        // Predicated region
        $region17: #{tpu_custom_call.1} parent=11 // pred_check
          %p235 = pneg %p86
        $region18: #{tpu_custom_call.1} parent=11 // pred_check_branch
          %237 = sbr.rel (%p235) target = $region20
        $region19: #{tpu_custom_call.1} parent=11 // pred_region
          _
        $region20: #{tpu_custom_call.1} parent=11 // pred_fallthru
          _
        // Predicated region
        $region21: #{tpu_custom_call.1} parent=11 // pred_check
          %p238 = pneg %p107
        $region22: #{tpu_custom_call.1} parent=11 // pred_check_branch
          %240 = sbr.rel (%p238) target = $region24
        $region23: #{tpu_custom_call.1} parent=11 // pred_region
          _
        $region24: #{tpu_custom_call.1} parent=11 // pred_fallthru
          _
        // Predicated region
        $region25: #{tpu_custom_call.1} parent=11 // pred_check
          %p241 = pneg %p128
        $region26: #{tpu_custom_call.1} parent=11 // pred_check_branch
          %243 = sbr.rel (%p241) target = $region28
        $region27: #{tpu_custom_call.1} parent=11 // pred_region
          _
        $region28: #{tpu_custom_call.1} parent=11 // pred_fallthru
          _
        // Predicated region
        $region29: #{tpu_custom_call.1} parent=11 // pred_check
          %p244 = pneg %p149
        $region30: #{tpu_custom_call.1} parent=11 // pred_check_branch
          %246 = sbr.rel (%p244) target = $region32
        $region31: #{tpu_custom_call.1} parent=11 // pred_region
          %248 = vsyncadd [#allocation3], 0
          %s249 = sshll.u32 %s5, 4
          %s250 = int_to_ptr.hbm [resolvable:$true] %s249
          %s251 = sshll.u32 [#allocation2], 4
          %s252 = int_to_ptr.vmem [resolvable:$true] %s251
          %257 = dma.hbm_to_vmem [thread:$0]  %s250, 2048, %s252, [#allocation3], 128, 128, 8
        $region32: #{tpu_custom_call.1} parent=11 // pred_fallthru
          _
        // Predicated region
        $region33: #{tpu_custom_call.1} parent=11 // pred_check
          %p258 = pneg %p170
        $region34: #{tpu_custom_call.1} parent=11 // pred_check_branch
          %260 = sbr.rel (%p258) target = $region36
        $region35: #{tpu_custom_call.1} parent=11 // pred_region
          _
        $region36: #{tpu_custom_call.1} parent=11 // pred_fallthru
          _
        // Predicated region
        $region37: #{tpu_custom_call.1} parent=11 // pred_check
          %p261 = pneg %p191
        $region38: #{tpu_custom_call.1} parent=11 // pred_check_branch
          %263 = sbr.rel (%p261) target = $region40
        $region39: #{tpu_custom_call.1} parent=11 // pred_region
          _
        $region40: #{tpu_custom_call.1} parent=11 // pred_fallthru
          _
      $region12: #{tpu_custom_call.1} parent=5 // pred_fallthru
        _
      %p264 = scmp.lt.s32.totalorder %s18, 2
      // Predicated region
      $region41: #{tpu_custom_call.1} parent=5 // pred_check
        %p265 = pneg %p264
      $region42: #{tpu_custom_call.1} parent=5 // pred_check_branch
        %267 = sbr.rel (%p265) target = $region44
      $region43: #{tpu_custom_call.1} parent=5 // pred_region
        // Predicated region
        $region45: #{tpu_custom_call.1} parent=43 // pred_check
          %p268 = pneg %p38
        $region46: #{tpu_custom_call.1} parent=43 // pred_check_branch
          %270 = sbr.rel (%p268) target = $region48
        $region47: #{tpu_custom_call.1} parent=43 // pred_region
          %s271 = smul.u32 13, %s18
          %p272 = scmp.lt.s32.totalorder %s271, 25
          %s273 = scalar_select %p272, %s271, 25
          %s274 = smul.addr %s273, 8
          %s275 = scalar_lea.vmem %s0, %s274
          %s276 = smul.u32 13, %s18
        $region48: #{tpu_custom_call.1} parent=43 // pred_fallthru
          _
      $region44: #{tpu_custom_call.1} parent=5 // pred_fallthru
        _
      %p277 = scmp.le.s32.totalorder 1, %s18
      %p278 = scmp.lt.s32.totalorder %s18, 3
      %p279 = pnand %p277, %p278
      %p280 = pneg %p279
      // Predicated region
      $region49: #{tpu_custom_call.1} parent=5 // pred_check
        _
      $region50: #{tpu_custom_call.1} parent=5 // pred_check_branch
        %282 = sbr.rel (%p279) target = $region52
      $region51: #{tpu_custom_call.1} parent=5 // pred_region
        %s283 = ssub.s32 %s18, 1
        // Predicated region
        $region53: #{tpu_custom_call.1} parent=51 // pred_check
          %p284 = pneg %p149
        $region54: #{tpu_custom_call.1} parent=51 // pred_check_branch
          %286 = sbr.rel (%p284) target = $region56
        $region55: #{tpu_custom_call.1} parent=51 // pred_region
          %288 = dma.done [#allocation3], 2048
        $region56: #{tpu_custom_call.1} parent=51 // pred_fallthru
          _
        %s289 = smul.u32 13, %s23
        %p290 = scmp.lt.s32.totalorder %s289, 25
        %s291 = scalar_select %p290, %s289, 25
        %s292 = smul.addr %s291, 8
        %s293 = scalar_lea.vmem %s0, %s292
        %p294 = pneg %p44
        %p295 = pneg %p41
        %p296 = pneg %p65
        %p297 = pneg %p62
        %p298 = pneg %p86
        %p299 = pneg %p83
        %p300 = pneg %p107
        %p301 = pneg %p104
        %p302 = pneg %p128
        %p303 = pneg %p125
        %p304 = pneg %p149
        %p305 = pneg %p146
        %p306 = pneg %p170
        %p307 = pneg %p167
        %p308 = pneg %p191
        %p309 = pneg %p188
        %p310 = pneg %p217
        %p311 = pneg %p214
        %s312 = sand.u32 %s204, 1
        %s313 = scalar_lea.sflag [#allocation4], %s312
        %s314 = sand.u32 %s204, 1
        %s315 = smul.addr %s314, 104
        %s316 = scalar_lea.vmem [#allocation5], %s315
        %s317 = smul.u32 13, %s23
        %p318 = scmp.lt.s32.totalorder %s317, 25
        %s319 = scalar_select %p318, %s317, 25
        %s320 = smul.addr %s319, 8
        %s321 = scalar_lea.vmem %s0, %s320
        %s322 = smul.u32 13, %s23
        %s323 = smul.u32 13, %s23
        %v324 = vld [vmem:[%s321] sm:$0xff]
        %v325 = vld [vmem:[%s321 + $0x8] sm:$0xff]
        %v326 = vld [vmem:[%s321 + $0x10] sm:$0xff]
        %v327 = vld [vmem:[%s321 + $0x18] sm:$0xff]
        %v328 = vld [vmem:[%s321 + $0x20] sm:$0xff]
        %v329 = vld [vmem:[%s321 + $0x28] sm:$0xff]
        %v330 = vld [vmem:[%s321 + $0x30] sm:$0xff]
        %v331 = vld [vmem:[%s321 + $0x38] sm:$0xff]
        %v332 = vld [vmem:[%s321 + $0x40] sm:$0xff]
        %v333 = vld [vmem:[%s321 + $0x48] sm:$0xff]
        %v334 = vld [vmem:[%s321 + $0x50] sm:$0xff]
        %v335 = vld [vmem:[%s321 + $0x58] sm:$0xff]
        %v336 = vld [vmem:[%s321 + $0x60] sm:$0xff]
        %v337 = vld [vmem:[%s1] sm:$0xff]
        %v338 = vld [vmem:[%s1 + $0x8] sm:$0xff]
        %v339 = vld [vmem:[%s2] sm:$0x1]
        %v341 = vperm.slane %v339, 0
        %vm343 = vcmask 130048
        %v345 = vsel %vm343, %v324, 0
        %v348 = vsel %vm343, %v325, 0
        %v351 = vsel %vm343, %v326, 0
        %v354 = vsel %vm343, %v327, 0
        %v357 = vsel %vm343, %v328, 0
        %v360 = vsel %vm343, %v329, 0
        %v363 = vsel %vm343, %v330, 0
        %v366 = vsel %vm343, %v331, 0
        %v369 = vsel %vm343, %v332, 0
        %v372 = vsel %vm343, %v333, 0
        %v375 = vsel %vm343, %v334, 0
        %v378 = vsel %vm343, %v335, 0
        %v381 = vsel %vm343, %v336, 0
        %383 = vmatpush.msra.mxu0 0.0
        %384 = vmatpush.msra.mxu0 0.0
        %385 = vmatpush.msra.mxu0 0.0
        %386 = vmatpush.msra.mxu0 0.0
        %387 = vmatpush.msra.mxu0 0.0
        %388 = vmatpush.msra.mxu0 0.0
        %389 = vmatpush.msra.mxu0 0.0
        %390 = vmatpush.msra.mxu0 0.0
        %391 = vmatpush.msra.mxu0 0.0
        %392 = vmatpush.msra.mxu0 0.0
        %393 = vmatpush.msra.mxu0 0.0
        %394 = vmatpush.msra.mxu0 0.0
        %395 = vmatpush.msra.mxu0 0.0
        %396 = vmatpush.msra.mxu0 0.0
        %397 = vmatpush.msra.mxu0 %v338
        %398 = vmatpush.msra.mxu0 %v337
        %399 = vmatmul.f32.gmra.mxu0 %v345
        %v400 = vpop.f32.mrf.mxu0
        %v401 = vadd.f32 %v341, %v400
        %402 = vmatmul.f32.gmra.mxu0 %v348
        %v403 = vpop.f32.mrf.mxu0
        %v404 = vadd.f32 %v341, %v403
        %405 = vmatmul.f32.gmra.mxu0 %v351
        %v406 = vpop.f32.mrf.mxu0
        %v407 = vadd.f32 %v341, %v406
        %408 = vmatmul.f32.gmra.mxu0 %v354
        %v409 = vpop.f32.mrf.mxu0
        %v410 = vadd.f32 %v341, %v409
        %411 = vmatmul.f32.gmra.mxu0 %v357
        %v412 = vpop.f32.mrf.mxu0
        %v413 = vadd.f32 %v341, %v412
        %414 = vmatmul.f32.gmra.mxu0 %v360
        %v415 = vpop.f32.mrf.mxu0
        %v416 = vadd.f32 %v341, %v415
        %417 = vmatmul.f32.gmra.mxu0 %v363
        %v418 = vpop.f32.mrf.mxu0
        %v419 = vadd.f32 %v341, %v418
        %420 = vmatmul.f32.gmra.mxu0 %v366
        %v421 = vpop.f32.mrf.mxu0
        %v422 = vadd.f32 %v341, %v421
        %423 = vmatmul.f32.gmra.mxu0 %v369
        %v424 = vpop.f32.mrf.mxu0
        %v425 = vadd.f32 %v341, %v424
        %426 = vmatmul.f32.gmra.mxu0 %v372
        %v427 = vpop.f32.mrf.mxu0
        %v428 = vadd.f32 %v341, %v427
        %429 = vmatmul.f32.gmra.mxu0 %v375
        %v430 = vpop.f32.mrf.mxu0
        %v431 = vadd.f32 %v341, %v430
        %432 = vmatmul.f32.gmra.mxu0 %v378
        %v433 = vpop.f32.mrf.mxu0
        %v434 = vadd.f32 %v341, %v433
        %435 = vmatmul.f32.gmra.mxu0 %v381
        %v436 = vpop.f32.mrf.mxu0
        %v437 = vadd.f32 %v341, %v436
        %438 = vdwg.mxu0
        %v439 = vmax.f32 %v401, 0.0
        %v440 = vmax.f32 %v404, 0.0
        %v441 = vmax.f32 %v407, 0.0
        %v442 = vmax.f32 %v410, 0.0
        %v443 = vmax.f32 %v413, 0.0
        %v444 = vmax.f32 %v416, 0.0
        %v445 = vmax.f32 %v419, 0.0
        %v446 = vmax.f32 %v422, 0.0
        %v447 = vmax.f32 %v425, 0.0
        %v448 = vmax.f32 %v428, 0.0
        %v449 = vmax.f32 %v431, 0.0
        %v450 = vmax.f32 %v434, 0.0
        %v451 = vmax.f32 %v437, 0.0
        %v452 = vld [vmem:[%s3] sm:$0xff]
        %v453 = vld [vmem:[%s3 + $0x8] sm:$0xff]
        %v454 = vld [vmem:[%s3 + $0x10] sm:$0xff]
        %v455 = vld [vmem:[%s3 + $0x18] sm:$0xff]
        %v456 = vld [vmem:[%s3 + $0x20] sm:$0xff]
        %v457 = vld [vmem:[%s3 + $0x28] sm:$0xff]
        %v458 = vld [vmem:[%s3 + $0x30] sm:$0xff]
        %v459 = vld [vmem:[%s3 + $0x38] sm:$0xff]
        %v460 = vld [vmem:[%s3 + $0x40] sm:$0xff]
        %v461 = vld [vmem:[%s3 + $0x48] sm:$0xff]
        %v462 = vld [vmem:[%s3 + $0x50] sm:$0xff]
        %v463 = vld [vmem:[%s3 + $0x58] sm:$0xff]
        %v464 = vld [vmem:[%s3 + $0x60] sm:$0xff]
        %v465 = vld [vmem:[%s3 + $0x68] sm:$0xff]
        %v466 = vld [vmem:[%s3 + $0x70] sm:$0xff]
        %v467 = vld [vmem:[%s3 + $0x78] sm:$0xff]
        %v468 = vld [vmem:[%s4] sm:$0x1]
        %v470 = vperm.slane %v468, 0
        %472 = vmatpush.msra.mxu0 %v467
        %473 = vmatpush.msra.mxu0 %v466
        %474 = vmatpush.msra.mxu0 %v465
        %475 = vmatpush.msra.mxu0 %v464
        %476 = vmatpush.msra.mxu0 %v463
        %477 = vmatpush.msra.mxu0 %v462
        %478 = vmatpush.msra.mxu0 %v461
        %479 = vmatpush.msra.mxu0 %v460
        %480 = vmatpush.msra.mxu0 %v459
        %481 = vmatpush.msra.mxu0 %v458
        %482 = vmatpush.msra.mxu0 %v457
        %483 = vmatpush.msra.mxu0 %v456
        %484 = vmatpush.msra.mxu0 %v455
        %485 = vmatpush.msra.mxu0 %v454
        %486 = vmatpush.msra.mxu0 %v453
        %487 = vmatpush.msra.mxu0 %v452
        %488 = vmatmul.f32.gmra.mxu0 %v439
        %v489 = vpop.f32.mrf.mxu0
        %v490 = vadd.f32 %v470, %v489
        %491 = vmatmul.f32.gmra.mxu0 %v440
        %v492 = vpop.f32.mrf.mxu0
        %v493 = vadd.f32 %v470, %v492
        %494 = vmatmul.f32.gmra.mxu0 %v441
        %v495 = vpop.f32.mrf.mxu0
        %v496 = vadd.f32 %v470, %v495
        %497 = vmatmul.f32.gmra.mxu0 %v442
        %v498 = vpop.f32.mrf.mxu0
        %v499 = vadd.f32 %v470, %v498
        %500 = vmatmul.f32.gmra.mxu0 %v443
        %v501 = vpop.f32.mrf.mxu0
        %v502 = vadd.f32 %v470, %v501
        %503 = vmatmul.f32.gmra.mxu0 %v444
        %v504 = vpop.f32.mrf.mxu0
        %v505 = vadd.f32 %v470, %v504
        %506 = vmatmul.f32.gmra.mxu0 %v445
        %v507 = vpop.f32.mrf.mxu0
        %v508 = vadd.f32 %v470, %v507
        %509 = vmatmul.f32.gmra.mxu0 %v446
        %v510 = vpop.f32.mrf.mxu0
        %v511 = vadd.f32 %v470, %v510
        %512 = vmatmul.f32.gmra.mxu0 %v447
        %v513 = vpop.f32.mrf.mxu0
        %v514 = vadd.f32 %v470, %v513
        %515 = vmatmul.f32.gmra.mxu0 %v448
        %v516 = vpop.f32.mrf.mxu0
        %v517 = vadd.f32 %v470, %v516
        %518 = vmatmul.f32.gmra.mxu0 %v449
        %v519 = vpop.f32.mrf.mxu0
        %v520 = vadd.f32 %v470, %v519
        %521 = vmatmul.f32.gmra.mxu0 %v450
        %v522 = vpop.f32.mrf.mxu0
        %v523 = vadd.f32 %v470, %v522
        %524 = vmatmul.f32.gmra.mxu0 %v451
        %v525 = vpop.f32.mrf.mxu0
        %v526 = vadd.f32 %v470, %v525
        %527 = vdwg.mxu0
        %v528 = vmax.f32 %v490, 0.0
        %v529 = vmax.f32 %v493, 0.0
        %v530 = vmax.f32 %v496, 0.0
        %v531 = vmax.f32 %v499, 0.0
        %v532 = vmax.f32 %v502, 0.0
        %v533 = vmax.f32 %v505, 0.0
        %v534 = vmax.f32 %v508, 0.0
        %v535 = vmax.f32 %v511, 0.0
        %v536 = vmax.f32 %v514, 0.0
        %v537 = vmax.f32 %v517, 0.0
        %v538 = vmax.f32 %v520, 0.0
        %v539 = vmax.f32 %v523, 0.0
        %v540 = vmax.f32 %v526, 0.0
        %v541 = vld [vmem:[#allocation2] sm:$0xff]
        %v542 = vld [vmem:[#allocation2 + $0x8] sm:$0xff]
        %v543 = vld [vmem:[#allocation2 + $0x10] sm:$0xff]
        %v544 = vld [vmem:[#allocation2 + $0x18] sm:$0xff]
        %v545 = vld [vmem:[#allocation2 + $0x20] sm:$0xff]
        %v546 = vld [vmem:[#allocation2 + $0x28] sm:$0xff]
        %v547 = vld [vmem:[#allocation2 + $0x30] sm:$0xff]
        %v548 = vld [vmem:[#allocation2 + $0x38] sm:$0xff]
        %v549 = vld [vmem:[#allocation2 + $0x40] sm:$0xff]
        %v550 = vld [vmem:[#allocation2 + $0x48] sm:$0xff]
        %v551 = vld [vmem:[#allocation2 + $0x50] sm:$0xff]
        %v552 = vld [vmem:[#allocation2 + $0x58] sm:$0xff]
        %v553 = vld [vmem:[#allocation2 + $0x60] sm:$0xff]
        %v554 = vld [vmem:[#allocation2 + $0x68] sm:$0xff]
        %v555 = vld [vmem:[#allocation2 + $0x70] sm:$0xff]
        %v556 = vld [vmem:[#allocation2 + $0x78] sm:$0xff]
        %v557 = vld [vmem:[%s6] sm:$0x1]
        %v559 = vperm.slane %v557, 0
        %561 = vmatpush.msra.mxu0 %v556
        %562 = vmatpush.msra.mxu0 %v555
        %563 = vmatpush.msra.mxu0 %v554
        %564 = vmatpush.msra.mxu0 %v553
        %565 = vmatpush.msra.mxu0 %v552
        %566 = vmatpush.msra.mxu0 %v551
        %567 = vmatpush.msra.mxu0 %v550
        %568 = vmatpush.msra.mxu0 %v549
        %569 = vmatpush.msra.mxu0 %v548
        %570 = vmatpush.msra.mxu0 %v547
        %571 = vmatpush.msra.mxu0 %v546
        %572 = vmatpush.msra.mxu0 %v545
        %573 = vmatpush.msra.mxu0 %v544
        %574 = vmatpush.msra.mxu0 %v543
        %575 = vmatpush.msra.mxu0 %v542
        %576 = vmatpush.msra.mxu0 %v541
        %577 = vmatmul.f32.gmra.mxu0 %v528
        %v578 = vpop.f32.mrf.mxu0
        %v579 = vadd.f32 %v559, %v578
        %580 = vmatmul.f32.gmra.mxu0 %v529
        %v581 = vpop.f32.mrf.mxu0
        %v582 = vadd.f32 %v559, %v581
        %583 = vmatmul.f32.gmra.mxu0 %v530
        %v584 = vpop.f32.mrf.mxu0
        %v585 = vadd.f32 %v559, %v584
        %586 = vmatmul.f32.gmra.mxu0 %v531
        %v587 = vpop.f32.mrf.mxu0
        %v588 = vadd.f32 %v559, %v587
        %589 = vmatmul.f32.gmra.mxu0 %v532
        %v590 = vpop.f32.mrf.mxu0
        %v591 = vadd.f32 %v559, %v590
        %592 = vmatmul.f32.gmra.mxu0 %v533
        %v593 = vpop.f32.mrf.mxu0
        %v594 = vadd.f32 %v559, %v593
        %595 = vmatmul.f32.gmra.mxu0 %v534
        %v596 = vpop.f32.mrf.mxu0
        %v597 = vadd.f32 %v559, %v596
        %598 = vmatmul.f32.gmra.mxu0 %v535
        %v599 = vpop.f32.mrf.mxu0
        %v600 = vadd.f32 %v559, %v599
        %601 = vmatmul.f32.gmra.mxu0 %v536
        %v602 = vpop.f32.mrf.mxu0
        %v603 = vadd.f32 %v559, %v602
        %604 = vmatmul.f32.gmra.mxu0 %v537
        %v605 = vpop.f32.mrf.mxu0
        %v606 = vadd.f32 %v559, %v605
        %607 = vmatmul.f32.gmra.mxu0 %v538
        %v608 = vpop.f32.mrf.mxu0
        %v609 = vadd.f32 %v559, %v608
        %610 = vmatmul.f32.gmra.mxu0 %v539
        %v611 = vpop.f32.mrf.mxu0
        %v612 = vadd.f32 %v559, %v611
        %613 = vmatmul.f32.gmra.mxu0 %v540
        %v614 = vpop.f32.mrf.mxu0
        %v615 = vadd.f32 %v559, %v614
        %616 = vdwg.mxu0
        %v617 = vld [vmem:[%s7] sm:$0x1]
        %vm618 = vcmp.gt.f32.partialorder %v617, 0.0
        %v619 = vmul.f32 %v579, %v579
        %v620 = vmul.f32 %v582, %v582
        %v621 = vmul.f32 %v585, %v585
        %v622 = vmul.f32 %v588, %v588
        %v623 = vmul.f32 %v591, %v591
        %v624 = vmul.f32 %v594, %v594
        %v625 = vmul.f32 %v597, %v597
        %v626 = vmul.f32 %v600, %v600
        %v627 = vmul.f32 %v603, %v603
        %v628 = vmul.f32 %v606, %v606
        %v629 = vmul.f32 %v609, %v609
        %v630 = vmul.f32 %v612, %v612
        %v631 = vmul.f32 %v615, %v615
        %v632 = vsel %vm618, 1, 0
        %v633 = vperm.slane %v632, 0
        %vm634 = vcmp.eq.s32.totalorder %v633, 1
        %v635 = vsel %vm634, %v619, %v579
        %v636 = vsel %vm634, %v620, %v582
        %v637 = vsel %vm634, %v621, %v585
        %v638 = vsel %vm634, %v622, %v588
        %v639 = vsel %vm634, %v623, %v591
        %v640 = vsel %vm634, %v624, %v594
        %v641 = vsel %vm634, %v625, %v597
        %v642 = vsel %vm634, %v626, %v600
        %v643 = vsel %vm634, %v627, %v603
        %v644 = vsel %vm634, %v628, %v606
        %v645 = vsel %vm634, %v629, %v609
        %v646 = vsel %vm634, %v630, %v612
        %v647 = vsel %vm634, %v631, %v615
        %648 = vst [vmem:[%s316] sm:$0xff] %v635
        %649 = vst [vmem:[%s316 + $0x8] sm:$0xff] %v636
        %650 = vst [vmem:[%s316 + $0x10] sm:$0xff] %v637
        %651 = vst [vmem:[%s316 + $0x18] sm:$0xff] %v638
        %652 = vst [vmem:[%s316 + $0x20] sm:$0xff] %v639
        %653 = vst [vmem:[%s316 + $0x28] sm:$0xff] %v640
        %654 = vst [vmem:[%s316 + $0x30] sm:$0xff] %v641
        %655 = vst [vmem:[%s316 + $0x38] sm:$0xff] %v642
        %656 = vst [vmem:[%s316 + $0x40] sm:$0xff] %v643
        %657 = vst [vmem:[%s316 + $0x48] sm:$0xff] %v644
        %658 = vst [vmem:[%s316 + $0x50] sm:$0xff] %v645
        %659 = vst [vmem:[%s316 + $0x58] sm:$0xff] %v646
        %660 = vst [vmem:[%s316 + $0x60] sm:$0xff] %v647
        %s661 = sand.u32 %s204, 1
        %s662 = scalar_lea.sflag [#allocation4], %s661
        %s663 = sand.u32 %s204, 1
        %s664 = smul.addr %s663, 104
        %s665 = scalar_lea.vmem [#allocation5], %s664
        // Predicated region
        $region57: #{tpu_custom_call.1} parent=51 // pred_check
          %p666 = pneg %p214
        $region58: #{tpu_custom_call.1} parent=51 // pred_check_branch
          %668 = sbr.rel (%p666) target = $region60
        $region59: #{tpu_custom_call.1} parent=51 // pred_region
          %s669 = smul.u32 13, %s23
          %671 = vsyncadd %s662, 0
          %s672 = smul.addr %s669, 8
          %s673 = scalar_lea.hbm %s8, %s672
          %s674 = sshll.u32 %s665, 4
          %s675 = int_to_ptr.vmem [resolvable:$true] %s674
          %s676 = sshll.u32 %s673, 4
          %s677 = int_to_ptr.hbm [resolvable:$true] %s676
          %682 = dma.vmem_to_hbm [thread:$0]  %s675, 1664, %s677, %s662, 128, 128, 8
        $region60: #{tpu_custom_call.1} parent=51 // pred_fallthru
          _
      $region52: #{tpu_custom_call.1} parent=5 // pred_fallthru
        _
      %p683 = scmp.le.s32.totalorder 2, %s18
      // Predicated region
      $region61: #{tpu_custom_call.1} parent=5 // pred_check
        %p684 = pneg %p683
      $region62: #{tpu_custom_call.1} parent=5 // pred_check_branch
        %686 = sbr.rel (%p684) target = $region64
      $region63: #{tpu_custom_call.1} parent=5 // pred_region
        %s687 = ssub.s32 %s18, 2
        // Predicated region
        $region65: #{tpu_custom_call.1} parent=63 // pred_check
          %p688 = pneg %p220
        $region66: #{tpu_custom_call.1} parent=63 // pred_check_branch
          %690 = sbr.rel (%p688) target = $region68
        $region67: #{tpu_custom_call.1} parent=63 // pred_region
          %s691 = sand.u32 %s205, 1
          %s692 = scalar_lea.sflag [#allocation4], %s691
          %s693 = sand.u32 %s205, 1
          %s694 = smul.addr %s693, 104
          %s695 = scalar_lea.vmem [#allocation5], %s694
          %697 = dma.done %s692, 1664
        $region68: #{tpu_custom_call.1} parent=63 // pred_fallthru
          _
      $region64: #{tpu_custom_call.1} parent=5 // pred_fallthru
        _
    $region6: #{tpu_custom_call.1} parent=1 // loop_footer
      %s22 = sadd.s32 1, %s18
    $region7: #{tpu_custom_call.1} parent=1 // loop_footer_branch
      %17 = sbr.rel target = $region3
    $region8: #{tpu_custom_call.1} parent=1 // loop_exit
      _
    %698 = vsyncpa [#allocation3], 1
    %s699 = scalar_lea.sflag [#allocation3], 1
    %700 = vsyncpa %s699, 1
    %701 = vsyncpa [#allocation4], 1
    %s702 = scalar_lea.sflag [#allocation4], 1
    %703 = vsyncpa %s702, 1

</llo_original>
